<compile_context>
chip_gen: v5e
topology: v5e:2x2
jax: 0.10.0
libtpu: 0.0.40
codegen_flags: <defaults>
</compile_context>

<pallas_src>
import functools

import jax
import jax.numpy as jnp
from jax.experimental import pallas as pl
from jax.experimental.pallas import tpu as pltpu


_PIPELINE_VMEM_BUDGET = 18 * 1024 * 1024   # 3 inputs x 2 pipeline buffers
_VMEM_LIMIT_BYTES = 32 * 1024 * 1024       # scoped VMEM (safe on v5e/v6e/v7x)
_TB_CAP = 8192                             # packed-row tile cap (post repack)


def _num_tensorcores():
    """2 on v7x (megacore split of the 'parallel' axis), 1 elsewhere."""
    try:
        kind = (jax.devices()[0].device_kind or "").lower()
        if "v7" in kind or "tpu7" in kind:
            return 2
    except Exception:
        pass
    return 1


def _triplet_loss_kernel(a_ref, p_ref, n_ref, o_ref, acc_ref, *,
                         alpha, d, g, n_valid):
    c = pl.program_id(0)            # core / partial-sum index ("parallel")
    j = pl.program_id(1)            # batch-block index        ("arbitrary")
    nbpc = pl.num_programs(1)
    tb, dp = a_ref.shape            # packed rows per tile, packed lane width

    # ---- init this core's deferred accumulator on its first batch block ----
    @pl.when(j == 0)
    def _init():
        acc_ref[...] = jnp.zeros_like(acc_ref)

    a = a_ref[...].astype(jnp.float32)
    p = p_ref[...].astype(jnp.float32)
    n = n_ref[...].astype(jnp.float32)
    dpos = a - p
    dneg = a - n
    # Fused: sum((a-p)^2 - (a-n)^2) per original row == dist_pos - dist_neg.
    diff = dpos * dpos - dneg * dneg                            # (tb, dp) f32

    if g > 1:
        # Segmented lane reduce on the MXU: each packed row carries g original
        # rows of d lanes; contract against a constant (dp, g) 0/1 matrix.
        lane = jax.lax.broadcasted_iota(jnp.int32, (dp, g), 0)
        col = jax.lax.broadcasted_iota(jnp.int32, (dp, g), 1)
        seg = jnp.logical_and(lane >= col * d,
                              lane < (col + 1) * d).astype(jnp.float32)
        per_row = jnp.dot(diff, seg,
                          preferred_element_type=jnp.float32,
                          precision=jax.lax.Precision.HIGHEST)  # (tb, g)
    else:
        per_row = jnp.sum(diff, axis=1, keepdims=True)          # (tb, 1)

    losses = jnp.maximum(per_row + alpha, 0.0)                  # (tb, g)

    # Only tail blocks can contain out-of-range rows -> gate the mask on a
    # scalar predicate so interior blocks skip the iota/compare/select.
    row0 = (c * nbpc + j) * tb      # intended (unclamped) packed-row offset
    needs_mask = row0 + tb > n_valid

    @pl.when(jnp.logical_not(needs_mask))
    def _acc_interior():
        acc_ref[...] += losses

    @pl.when(needs_mask)
    def _acc_tail():
        rows = row0 + jax.lax.broadcasted_iota(jnp.int32, losses.shape, 0)
        acc_ref[...] += jnp.where(rows < n_valid, losses, 0.0)

    # ---- finalize: single reduce of the accumulator, once per core ----
    @pl.when(j == nbpc - 1)
    def _finalize():
        o_ref[...] = jnp.full(o_ref.shape, jnp.sum(acc_ref[...]),
                              dtype=jnp.float32)


def rgbd_triplet_loss(latent_anchor, latent_pos, latent_neg, alpha=1.0):
    """Pallas implementation of RGBD_TripletLoss.forward. Returns a scalar."""
    assert latent_anchor.shape == latent_pos.shape == latent_neg.shape
    assert latent_anchor.ndim == 2
    B, D = latent_anchor.shape

    # ---- lane-dense repack: g original rows of D lanes -> one 128-lane row.
    # Free row-major reshape; makes the DMA dense and cuts vector-op count
    # ~128/D x for small latent dims.
    if D < 128 and 128 % D == 0 and B % (128 // D) == 0:
        g = 128 // D
    else:
        g = 1   # TODO(synk): general-D repack (pad a single remainder tile).
    bp, dp = B // g, D * g
    a = latent_anchor.reshape(bp, dp)
    p = latent_pos.reshape(bp, dp)
    n = latent_neg.reshape(bp, dp)

    ncores = _num_tensorcores()

    # ---- batch-tile sizing against the lane-padded VMEM footprint ----
    itemsize = jnp.dtype(a.dtype).itemsize
    sub = max(8, 32 // itemsize)               # sublane: f32->8, bf16->16, i8->32
    lane_w = pl.cdiv(dp, 128) * 128            # lanes pad to 128 in VMEM
    bytes_per_row = (3 * 2 * lane_w * itemsize   # 3 inputs x double buffer
                     + 4 * lane_w * 4            # f32 upcast intermediates
                     + 4 * g)                    # accumulator
    tb = (_PIPELINE_VMEM_BUDGET // bytes_per_row) // sub * sub
    tb = int(max(sub, min(_TB_CAP, tb)))
    rows_per_core = pl.cdiv(bp, ncores)
    tb = min(tb, pl.cdiv(rows_per_core, sub) * sub)   # never bigger than needed
    nblk = pl.cdiv(bp, tb)                     # valid blocks along packed rows
    nbpc = pl.cdiv(nblk, ncores)               # batch blocks per core

    kernel = functools.partial(_triplet_loss_kernel,
                               alpha=float(alpha), d=D, g=g, n_valid=bp)

    def in_idx(c, jj):
        # Clamp trailing (empty) blocks onto the last valid block: keeps every
        # DMA in bounds with no wrapper-side padding copies; the in-kernel row
        # mask zeroes their contribution.
        return (jnp.minimum(c * nbpc + jj, nblk - 1), 0)

    in_spec = pl.BlockSpec((tb, dp), in_idx)
    out_spec = pl.BlockSpec((1, 1, 128), lambda c, jj: (c, 0, 0))

    partials = pl.pallas_call(
        kernel,
        out_shape=jax.ShapeDtypeStruct((ncores, 1, 128), jnp.float32),
        grid_spec=pltpu.PrefetchScalarGridSpec(
            num_scalar_prefetch=0,
            grid=(ncores, nbpc),
            in_specs=[in_spec, in_spec, in_spec],
            out_specs=out_spec,
            scratch_shapes=[pltpu.VMEM((tb, g), jnp.float32)],
        ),
        compiler_params=pltpu.CompilerParams(
            dimension_semantics=("parallel", "arbitrary"),
            vmem_limit_bytes=_VMEM_LIMIT_BYTES),
    )(a, p, n)

    # One scalar partial per core (broadcast across its 128-lane tile).
    return jnp.sum(partials[:, 0, 0]) * (1.0 / float(B))


def _reference(a, p, n, alpha=1.0):
    dpos = jnp.sum((a - p) ** 2, axis=1)
    dneg = jnp.sum((a - n) ** 2, axis=1)
    return jnp.mean(jax.nn.relu(dpos - dneg + alpha))


if __name__ == "__main__":
    alpha = 1.0

    # Lane-dense (packed) path: D=32 -> 4 original rows per 128-lane row,
    # with a ragged tail (100 rows -> 25 packed rows inside a 32-row tile).
    ka, kp, kn = jax.random.split(jax.random.PRNGKey(0), 3)
    B, D = 100, 32
    anchor = jax.random.normal(ka, (B, D), dtype=jnp.float32)
    pos = jax.random.normal(kp, (B, D), dtype=jnp.float32)
    neg = jax.random.normal(kn, (B, D), dtype=jnp.float32)
    loss = jax.block_until_ready(rgbd_triplet_loss(anchor, pos, neg, alpha))
    ref = _reference(anchor, pos, neg, alpha)
    assert jnp.allclose(loss, ref, rtol=1e-4, atol=1e-4), (loss, ref)

    # Fallback path: D does not divide 128 (no repack), ragged batch.
    ka, kp, kn = jax.random.split(jax.random.PRNGKey(1), 3)
    B2, D2 = 10, 48
    a2 = jax.random.normal(ka, (B2, D2), dtype=jnp.float32)
    p2 = jax.random.normal(kp, (B2, D2), dtype=jnp.float32)
    n2 = jax.random.normal(kn, (B2, D2), dtype=jnp.float32)
    loss2 = jax.block_until_ready(rgbd_triplet_loss(a2, p2, n2, alpha))
    ref2 = _reference(a2, p2, n2, alpha)
    assert jnp.allclose(loss2, ref2, rtol=1e-4, atol=1e-4), (loss2, ref2)

    print("KERNEL_OK")
</pallas_src>

<mosaic_0001>
module attributes {stable_mosaic.version = 11 : i64} {
  func.func @_triplet_loss_kernel(%arg0: i32, %arg1: i32, %arg2: memref<32x128xf32, #tpu.memory_space<vmem>>, %arg3: memref<32x128xf32, #tpu.memory_space<vmem>>, %arg4: memref<32x128xf32, #tpu.memory_space<vmem>>, %arg5: memref<1x1x128xf32, #tpu.memory_space<vmem>>, %arg6: memref<32x4xf32, #tpu.memory_space<vmem>>) attributes {dimension_semantics = [#tpu.dimension_semantics<parallel>, #tpu.dimension_semantics<arbitrary>], iteration_bounds = array<i64: 1, 1>, scalar_prefetch = 0 : i64, scratch_operands = 1 : i64, tpu.core_type = #tpu.core_type<tc>, window_params = [{transform_indices = @transform_0, window_bounds = array<i64: 32, 128>}, {transform_indices = @transform_1, window_bounds = array<i64: 32, 128>}, {transform_indices = @transform_2, window_bounds = array<i64: 32, 128>}, {transform_indices = @transform_3, window_bounds = array<i64: 1, 1, 128>}]} {
    %c0_i32 = arith.constant 0 : i32
    %0 = arith.cmpi eq, %arg1, %c0_i32 : i32
    %1 = arith.extui %0 : i1 to i32
    %c0_i32_0 = arith.constant 0 : i32
    %2 = arith.cmpi ne, %1, %c0_i32_0 : i32
    scf.if %2 {
      %cst_16 = arith.constant 0.000000e+00 : f32
      %42 = vector.broadcast %cst_16 : f32 to vector<32x4xf32>
      %c0_17 = arith.constant 0 : index
      %c0_18 = arith.constant 0 : index
      %43 = vector.load %arg6[%c0_17, %c0_18] : memref<32x4xf32, #tpu.memory_space<vmem>>, vector<32x4xf32>
      tpu.vector_store %arg6[%c0_17, %c0_18], %42 {strides = array<i32>} : memref<32x4xf32, #tpu.memory_space<vmem>>, vector<32x4xf32>,
    } else {
    }
    %c0 = arith.constant 0 : index
    %c0_1 = arith.constant 0 : index
    %3 = vector.load %arg2[%c0, %c0_1] : memref<32x128xf32, #tpu.memory_space<vmem>>, vector<32x128xf32>
    %c0_2 = arith.constant 0 : index
    %c0_3 = arith.constant 0 : index
    %4 = vector.load %arg3[%c0_2, %c0_3] : memref<32x128xf32, #tpu.memory_space<vmem>>, vector<32x128xf32>
    %c0_4 = arith.constant 0 : index
    %c0_5 = arith.constant 0 : index
    %5 = vector.load %arg4[%c0_4, %c0_5] : memref<32x128xf32, #tpu.memory_space<vmem>>, vector<32x128xf32>
    %6 = arith.subf %3, %4 : vector<32x128xf32>
    %7 = arith.subf %3, %5 : vector<32x128xf32>
    %8 = arith.mulf %6, %6 : vector<32x128xf32>
    %9 = arith.mulf %7, %7 : vector<32x128xf32>
    %10 = arith.subf %8, %9 : vector<32x128xf32>
    %11 = tpu.iota {dimensions = array<i32: 0>} : vector<128x4xi32>
    %12 = tpu.iota {dimensions = array<i32: 1>} : vector<128x4xi32>
    %c32_i32 = arith.constant 32 : i32
    %13 = vector.broadcast %c32_i32 : i32 to vector<128x4xi32>
    %14 = arith.muli %12, %13 : vector<128x4xi32>
    %15 = arith.cmpi sge, %11, %14 : vector<128x4xi32>
    %c1_i32 = arith.constant 1 : i32
    %16 = vector.broadcast %c1_i32 : i32 to vector<128x4xi32>
    %17 = arith.addi %12, %16 : vector<128x4xi32>
    %c32_i32_6 = arith.constant 32 : i32
    %18 = vector.broadcast %c32_i32_6 : i32 to vector<128x4xi32>
    %19 = arith.muli %17, %18 : vector<128x4xi32>
    %20 = arith.cmpi slt, %11, %19 : vector<128x4xi32>
    %21 = arith.andi %15, %20 : vector<128x4xi1>
    %22 = arith.extui %21 : vector<128x4xi1> to vector<128x4xi32>
    %23 = arith.sitofp %22 : vector<128x4xi32> to vector<128x4xf32>
    %cst = arith.constant dense<0.000000e+00> : vector<32x4xf32>
    %24 = tpu.matmul %10, %23, %cst {dimension_numbers = #tpu.dot_dimension_numbers<[1], [0], [0], [1], [0, 0, 1, 1], [], []>, precision = #tpu.contract_precision<fp32>} : vector<32x128xf32>, vector<128x4xf32>, vector<32x4xf32> -> vector<32x4xf32>
    %cst_7 = arith.constant 1.000000e+00 : f32
    %25 = vector.broadcast %cst_7 : f32 to vector<32x4xf32>
    %26 = arith.addf %24, %25 : vector<32x4xf32>
    %cst_8 = arith.constant 0.000000e+00 : f32
    %27 = vector.broadcast %cst_8 : f32 to vector<32x4xf32>
    %28 = arith.maximumf %26, %27 : vector<32x4xf32>
    %c1_i32_9 = arith.constant 1 : i32
    %29 = arith.muli %arg0, %c1_i32_9 : i32
    %30 = arith.addi %29, %arg1 : i32
    %c32_i32_10 = arith.constant 32 : i32
    %31 = arith.muli %30, %c32_i32_10 : i32
    %c32_i32_11 = arith.constant 32 : i32
    %32 = arith.addi %31, %c32_i32_11 : i32
    %c25_i32 = arith.constant 25 : i32
    %33 = arith.cmpi sgt, %32, %c25_i32 : i32
    %true = arith.constant true
    %34 = arith.xori %33, %true : i1
    %35 = arith.extui %34 : i1 to i32
    %c0_i32_12 = arith.constant 0 : i32
    %36 = arith.cmpi ne, %35, %c0_i32_12 : i32
    scf.if %36 {
      %c0_16 = arith.constant 0 : index
      %c0_17 = arith.constant 0 : index
      %42 = vector.load %arg6[%c0_16, %c0_17] : memref<32x4xf32, #tpu.memory_space<vmem>>, vector<32x4xf32>
      %43 = arith.addf %42, %28 : vector<32x4xf32>
      %c0_18 = arith.constant 0 : index
      %c0_19 = arith.constant 0 : index
      %44 = vector.load %arg6[%c0_18, %c0_19] : memref<32x4xf32, #tpu.memory_space<vmem>>, vector<32x4xf32>
      tpu.vector_store %arg6[%c0_18, %c0_19], %43 {strides = array<i32>} : memref<32x4xf32, #tpu.memory_space<vmem>>, vector<32x4xf32>,
    } else {
    }
    %37 = arith.extui %33 : i1 to i32
    %c0_i32_13 = arith.constant 0 : i32
    %38 = arith.cmpi ne, %37, %c0_i32_13 : i32
    scf.if %38 {
      %42 = tpu.iota {dimensions = array<i32: 0>} : vector<32x4xi32>
      %43 = vector.broadcast %31 : i32 to vector<32x4xi32>
      %44 = arith.addi %43, %42 : vector<32x4xi32>
      %c0_16 = arith.constant 0 : index
      %c0_17 = arith.constant 0 : index
      %45 = vector.load %arg6[%c0_16, %c0_17] : memref<32x4xf32, #tpu.memory_space<vmem>>, vector<32x4xf32>
      %c25_i32_18 = arith.constant 25 : i32
      %46 = vector.broadcast %c25_i32_18 : i32 to vector<32x4xi32>
      %47 = arith.cmpi slt, %44, %46 : vector<32x4xi32>
      %cst_19 = arith.constant 0.000000e+00 : f32
      %48 = vector.broadcast %cst_19 : f32 to vector<32x4xf32>
      %49 = arith.select %47, %28, %48 : vector<32x4xi1>, vector<32x4xf32>
      %50 = arith.addf %45, %49 : vector<32x4xf32>
      %c0_20 = arith.constant 0 : index
      %c0_21 = arith.constant 0 : index
      %51 = vector.load %arg6[%c0_20, %c0_21] : memref<32x4xf32, #tpu.memory_space<vmem>>, vector<32x4xf32>
      tpu.vector_store %arg6[%c0_20, %c0_21], %50 {strides = array<i32>} : memref<32x4xf32, #tpu.memory_space<vmem>>, vector<32x4xf32>,
    } else {
    }
    %c0_i32_14 = arith.constant 0 : i32
    %39 = arith.cmpi eq, %arg1, %c0_i32_14 : i32
    %40 = arith.extui %39 : i1 to i32
    %c0_i32_15 = arith.constant 0 : i32
    %41 = arith.cmpi ne, %40, %c0_i32_15 : i32
    scf.if %41 {
      %c0_16 = arith.constant 0 : index
      %c0_17 = arith.constant 0 : index
      %42 = vector.load %arg6[%c0_16, %c0_17] : memref<32x4xf32, #tpu.memory_space<vmem>>, vector<32x4xf32>
      %43 = vector.shape_cast %42 : vector<32x4xf32> to vector<1x32x4xf32>
      %cst_18 = arith.constant dense<0.000000e+00> : vector<1xf32>
      %44 = vector.multi_reduction <add>, %43, %cst_18 [1, 2] : vector<1x32x4xf32> to vector<1xf32>
      %45 = vector.shape_cast %44 : vector<1xf32> to vector<1x1x1xf32>
      %46 = vector.extract %45[0, 0, 0] : f32 from vector<1x1x1xf32>
      %47 = vector.broadcast %46 : f32 to vector<1x1x128xf32>
      %c0_19 = arith.constant 0 : index
      %c0_20 = arith.constant 0 : index
      %c0_21 = arith.constant 0 : index
      %48 = vector.load %arg5[%c0_19, %c0_20, %c0_21] : memref<1x1x128xf32, #tpu.memory_space<vmem>>, vector<1x1x128xf32>
      tpu.vector_store %arg5[%c0_19, %c0_20, %c0_21], %47 {strides = array<i32>} : memref<1x1x128xf32, #tpu.memory_space<vmem>>, vector<1x1x128xf32>,
    } else {
    }
    return
  }
  func.func @transform_0(%arg0: i32, %arg1: i32) -> (i32, i32) {
    %c1_i32 = arith.constant 1 : i32
    %0 = arith.muli %arg0, %c1_i32 : i32
    %1 = arith.addi %0, %arg1 : i32
    %c0_i32 = arith.constant 0 : i32
    %2 = arith.minsi %1, %c0_i32 : i32
    %c0_i32_0 = arith.constant 0 : i32
    %c0_i32_1 = arith.constant 0 : i32
    return %2, %c0_i32_0 : i32, i32
  }
  func.func @transform_1(%arg0: i32, %arg1: i32) -> (i32, i32) {
    %c1_i32 = arith.constant 1 : i32
    %0 = arith.muli %arg0, %c1_i32 : i32
    %1 = arith.addi %0, %arg1 : i32
    %c0_i32 = arith.constant 0 : i32
    %2 = arith.minsi %1, %c0_i32 : i32
    %c0_i32_0 = arith.constant 0 : i32
    %c0_i32_1 = arith.constant 0 : i32
    return %2, %c0_i32_0 : i32, i32
  }
  func.func @transform_2(%arg0: i32, %arg1: i32) -> (i32, i32) {
    %c1_i32 = arith.constant 1 : i32
    %0 = arith.muli %arg0, %c1_i32 : i32
    %1 = arith.addi %0, %arg1 : i32
    %c0_i32 = arith.constant 0 : i32
    %2 = arith.minsi %1, %c0_i32 : i32
    %c0_i32_0 = arith.constant 0 : i32
    %c0_i32_1 = arith.constant 0 : i32
    return %2, %c0_i32_0 : i32, i32
  }
  func.func @transform_3(%arg0: i32, %arg1: i32) -> (i32, i32, i32) {
    %c0_i32 = arith.constant 0 : i32
    %c0_i32_0 = arith.constant 0 : i32
    %c0_i32_1 = arith.constant 0 : i32
    return %arg0, %c0_i32, %c0_i32_0 : i32, i32, i32
  }
}

</mosaic_0001>

<llo_original>
// kernel: tpu_custom_call.1
$region0: #{tpu_custom_call.1}
  #allocation0 [shape = 'u32[]', space=smem, size = 0x4, offset = 0x4, fixed_abs, tag = 'smem constant byte address 0x4 - core index']
  #allocation1 [shape = 'u32[72,128]{1,0:T(1,128)}', space=vmem, size = 0x9000, scoped, tag = 'internal scratch']
  #allocation2 [shape = 'f32[32,4]{1,0:T(8,128)}', space=vmem, size = 0x4000, scoped, tag = 'scratch operand']
  %s0 = inlined_call_operand.hbm [shape: f32[25,128], index: 0, kind: input, shape index: {}]
  %s1 = inlined_call_operand.hbm [shape: f32[25,128], index: 1, kind: input, shape index: {}]
  %s2 = inlined_call_operand.hbm [shape: f32[25,128], index: 2, kind: input, shape index: {}]
  %s3 = inlined_call_operand.hbm [shape: f32[1,1,128], index: 3, kind: output, shape index: {}]
  %s4 = sld [smem:[#allocation0]]
  $region50: #{tpu_custom_call.1} parent=0
    _
  %s6 = ssub.s32 1, %s4
  %s7 = scalar_select 0, %s6, %s4
  $region1: #{tpu_custom_call.1} parent=0
    #allocation3 [shape = 'u8[16384]{0}', space=vmem, size = 0x4000, scoped, tag = 'input window, operand 0, single buffered']
    #allocation4 [shape = 's32[1]{0}', space=sflag, size = 0x4, scoped, tag = 'scoped memory for tpu_custom_call.1']
    #allocation5 [shape = 's32[1]{0}', space=sflag, size = 0x4, scoped, tag = 'scoped memory for tpu_custom_call.1']
    #allocation6 [shape = 'u8[16384]{0}', space=vmem, size = 0x4000, scoped, tag = 'input window, operand 1, single buffered']
    #allocation7 [shape = 's32[1]{0}', space=sflag, size = 0x4, scoped, tag = 'scoped memory for tpu_custom_call.1']
    #allocation8 [shape = 'u8[16384]{0}', space=vmem, size = 0x4000, scoped, tag = 'input window, operand 2, single buffered']
    #allocation9 [shape = 'u8[512]{0}', space=vmem, size = 0x400, scoped, tag = 'output window, operand 0, single buffered']
    %8 = vsyncpa [#allocation4], 0
    %9 = vsyncpa [#allocation7], 0
    %10 = vsyncpa [#allocation5], 0
    // Predicated region
    $region2: #{tpu_custom_call.1} parent=1 // pred_check
      _
    $region3: #{tpu_custom_call.1} parent=1 // pred_check_branch
      %12 = sbr.rel (0) target = $region5
    $region4: #{tpu_custom_call.1} parent=1 // pred_region
      %s13 = sadd.s32 0, 0
      %p14 = scmp.lt.s32.totalorder %s13, 0
      %s15 = scalar_select %p14, %s13, 0
      %s16 = smul.u32 4, %s15
      %18 = vsyncadd [#allocation4], 0
      %s19 = smul.addr %s16, 8
      %s20 = scalar_lea.hbm %s0, %s19
      %s21 = sshll.u32 %s20, 4
      %s22 = int_to_ptr.hbm [resolvable:$true] %s21
      %s23 = sshll.u32 [#allocation3], 4
      %s24 = int_to_ptr.vmem [resolvable:$true] %s23
      %29 = dma.hbm_to_vmem [thread:$0]  %s22, 512, %s24, [#allocation4], 128, 128, 8
    $region5: #{tpu_custom_call.1} parent=1 // pred_fallthru
      _
    // Predicated region
    $region6: #{tpu_custom_call.1} parent=1 // pred_check
      _
    $region7: #{tpu_custom_call.1} parent=1 // pred_check_branch
      %31 = sbr.rel (0) target = $region9
    $region8: #{tpu_custom_call.1} parent=1 // pred_region
      %s32 = sadd.s32 0, 0
      %p33 = scmp.lt.s32.totalorder %s32, 0
      %s34 = scalar_select %p33, %s32, 0
      %s35 = smul.u32 4, %s34
      %37 = vsyncadd [#allocation7], 0
      %s38 = smul.addr %s35, 8
      %s39 = scalar_lea.hbm %s1, %s38
      %s40 = sshll.u32 %s39, 4
      %s41 = int_to_ptr.hbm [resolvable:$true] %s40
      %s42 = sshll.u32 [#allocation6], 4
      %s43 = int_to_ptr.vmem [resolvable:$true] %s42
      %48 = dma.hbm_to_vmem [thread:$0]  %s41, 512, %s43, [#allocation7], 128, 128, 8
    $region9: #{tpu_custom_call.1} parent=1 // pred_fallthru
      _
    // Predicated region
    $region10: #{tpu_custom_call.1} parent=1 // pred_check
      _
    $region11: #{tpu_custom_call.1} parent=1 // pred_check_branch
      %50 = sbr.rel (0) target = $region13
    $region12: #{tpu_custom_call.1} parent=1 // pred_region
      %s51 = sadd.s32 0, 0
      %p52 = scmp.lt.s32.totalorder %s51, 0
      %s53 = scalar_select %p52, %s51, 0
      %s54 = smul.u32 4, %s53
      %56 = vsyncadd [#allocation7], 0
      %s57 = smul.addr %s54, 8
      %s58 = scalar_lea.hbm %s2, %s57
      %s59 = sshll.u32 %s58, 4
      %s60 = int_to_ptr.hbm [resolvable:$true] %s59
      %s61 = sshll.u32 [#allocation8], 4
      %s62 = int_to_ptr.vmem [resolvable:$true] %s61
      %67 = dma.hbm_to_vmem [thread:$0]  %s60, 512, %s62, [#allocation7], 128, 128, 8
    $region13: #{tpu_custom_call.1} parent=1 // pred_fallthru
      _
    // Predicated region
    $region14: #{tpu_custom_call.1} parent=1 // pred_check
      _
    $region15: #{tpu_custom_call.1} parent=1 // pred_check_branch
      %69 = sbr.rel (0) target = $region17
    $region16: #{tpu_custom_call.1} parent=1 // pred_region
      %71 = dma.done [#allocation4], 512
    $region17: #{tpu_custom_call.1} parent=1 // pred_fallthru
      _
    // Predicated region
    $region18: #{tpu_custom_call.1} parent=1 // pred_check
      _
    $region19: #{tpu_custom_call.1} parent=1 // pred_check_branch
      %73 = sbr.rel (0) target = $region21
    $region20: #{tpu_custom_call.1} parent=1 // pred_region
      %75 = dma.done [#allocation7], 512
    $region21: #{tpu_custom_call.1} parent=1 // pred_fallthru
      _
    // Predicated region
    $region22: #{tpu_custom_call.1} parent=1 // pred_check
      _
    $region23: #{tpu_custom_call.1} parent=1 // pred_check_branch
      %77 = sbr.rel (0) target = $region25
    $region24: #{tpu_custom_call.1} parent=1 // pred_region
      %79 = dma.done [#allocation7], 512
    $region25: #{tpu_custom_call.1} parent=1 // pred_fallthru
      _
    %s80 = sadd.s32 0, 0
    %p81 = scmp.lt.s32.totalorder %s80, 0
    %s82 = scalar_select %p81, %s80, 0
    %s83 = smul.u32 4, %s82
    %s84 = sadd.s32 0, 0
    %p85 = scmp.lt.s32.totalorder %s84, 0
    %s86 = scalar_select %p85, %s84, 0
    %s87 = smul.u32 4, %s86
    %s88 = sadd.s32 0, 0
    %p89 = scmp.lt.s32.totalorder %s88, 0
    %s90 = scalar_select %p89, %s88, 0
    %s91 = smul.u32 4, %s90
    %p92 = scmp.eq.s32.totalorder 0, 0
    // Predicated region
    $region26: #{tpu_custom_call.1} parent=1 // pred_check
      %p93 = pneg %p92
    $region27: #{tpu_custom_call.1} parent=1 // pred_check_branch
      %95 = sbr.rel (%p93) target = $region29
    $region28: #{tpu_custom_call.1} parent=1 // pred_region
      %vm96 = vcmask 31744
      %97 = vst.msk [vmem:[#allocation2] sm:$0xff] %vm96, 0.0
      %98 = vst.msk [vmem:[#allocation2 + $0x8] sm:$0xff] %vm96, 0.0
      %99 = vst.msk [vmem:[#allocation2 + $0x10] sm:$0xff] %vm96, 0.0
      %100 = vst.msk [vmem:[#allocation2 + $0x18] sm:$0xff] %vm96, 0.0
    $region29: #{tpu_custom_call.1} parent=1 // pred_fallthru
      _
    %v101 = vld [vmem:[#allocation3] sm:$0xff]
    %v102 = vld [vmem:[#allocation3 + $0x8] sm:$0xff]
    %v103 = vld [vmem:[#allocation3 + $0x10] sm:$0xff]
    %v104 = vld [vmem:[#allocation3 + $0x18] sm:$0xff]
    %v105 = vld [vmem:[#allocation6] sm:$0xff]
    %v106 = vld [vmem:[#allocation6 + $0x8] sm:$0xff]
    %v107 = vld [vmem:[#allocation6 + $0x10] sm:$0xff]
    %v108 = vld [vmem:[#allocation6 + $0x18] sm:$0xff]
    %v109 = vld [vmem:[#allocation8] sm:$0xff]
    %v110 = vld [vmem:[#allocation8 + $0x8] sm:$0xff]
    %v111 = vld [vmem:[#allocation8 + $0x10] sm:$0xff]
    %v112 = vld [vmem:[#allocation8 + $0x18] sm:$0xff]
    %v113 = vsub.f32 %v101, %v105
    %v114 = vsub.f32 %v102, %v106
    %v115 = vsub.f32 %v103, %v107
    %v116 = vsub.f32 %v104, %v108
    %v117 = vsub.f32 %v101, %v109
    %v118 = vsub.f32 %v102, %v110
    %v119 = vsub.f32 %v103, %v111
    %v120 = vsub.f32 %v104, %v112
    %v121 = vmul.f32 %v113, %v113
    %v122 = vmul.f32 %v114, %v114
    %v123 = vmul.f32 %v115, %v115
    %v124 = vmul.f32 %v116, %v116
    %v125 = vmul.f32 %v117, %v117
    %v126 = vmul.f32 %v118, %v118
    %v127 = vmul.f32 %v119, %v119
    %v128 = vmul.f32 %v120, %v120
    %v129 = vsub.f32 %v121, %v125
    %v130 = vsub.f32 %v122, %v126
    %v131 = vsub.f32 %v123, %v127
    %v132 = vsub.f32 %v124, %v128
    %v133 = vlaneseq
    %v134 = vshrl.u32 %v133, 7
    %v135 = vadd.s32 %v134, 8
    %v136 = vadd.s32 %v134, 16
    %v137 = vadd.s32 %v134, 24
    %v138 = vadd.s32 %v134, 32
    %v139 = vadd.s32 %v134, 40
    %v140 = vadd.s32 %v134, 48
    %v141 = vadd.s32 %v134, 56
    %v142 = vadd.s32 %v134, 64
    %v143 = vadd.s32 %v134, 72
    %v144 = vadd.s32 %v134, 80
    %v145 = vadd.s32 %v134, 88
    %v146 = vadd.s32 %v134, 96
    %v147 = vadd.s32 %v134, 104
    %v148 = vadd.s32 %v134, 112
    %v149 = vadd.s32 %v134, 120
    %v150 = vlaneseq
    %v151 = vand.u32 %v150, 127
    %v152 = vmul.u32 %v151, 32
    %vm153 = vcmp.ge.s32.totalorder %v134, %v152
    %vm154 = vcmp.ge.s32.totalorder %v135, %v152
    %vm155 = vcmp.ge.s32.totalorder %v136, %v152
    %vm156 = vcmp.ge.s32.totalorder %v137, %v152
    %vm157 = vcmp.ge.s32.totalorder %v138, %v152
    %vm158 = vcmp.ge.s32.totalorder %v139, %v152
    %vm159 = vcmp.ge.s32.totalorder %v140, %v152
    %vm160 = vcmp.ge.s32.totalorder %v141, %v152
    %vm161 = vcmp.ge.s32.totalorder %v142, %v152
    %vm162 = vcmp.ge.s32.totalorder %v143, %v152
    %vm163 = vcmp.ge.s32.totalorder %v144, %v152
    %vm164 = vcmp.ge.s32.totalorder %v145, %v152
    %vm165 = vcmp.ge.s32.totalorder %v146, %v152
    %vm166 = vcmp.ge.s32.totalorder %v147, %v152
    %vm167 = vcmp.ge.s32.totalorder %v148, %v152
    %vm168 = vcmp.ge.s32.totalorder %v149, %v152
    %v169 = vadd.s32 %v151, 1
    %v170 = vmul.u32 %v169, 32
    %vm171 = vcmp.lt.s32.totalorder %v134, %v170
    %vm172 = vcmp.lt.s32.totalorder %v135, %v170
    %vm173 = vcmp.lt.s32.totalorder %v136, %v170
    %vm174 = vcmp.lt.s32.totalorder %v137, %v170
    %vm175 = vcmp.lt.s32.totalorder %v138, %v170
    %vm176 = vcmp.lt.s32.totalorder %v139, %v170
    %vm177 = vcmp.lt.s32.totalorder %v140, %v170
    %vm178 = vcmp.lt.s32.totalorder %v141, %v170
    %vm179 = vcmp.lt.s32.totalorder %v142, %v170
    %vm180 = vcmp.lt.s32.totalorder %v143, %v170
    %vm181 = vcmp.lt.s32.totalorder %v144, %v170
    %vm182 = vcmp.lt.s32.totalorder %v145, %v170
    %vm183 = vcmp.lt.s32.totalorder %v146, %v170
    %vm184 = vcmp.lt.s32.totalorder %v147, %v170
    %vm185 = vcmp.lt.s32.totalorder %v148, %v170
    %vm186 = vcmp.lt.s32.totalorder %v149, %v170
    %vm187 = vmand %vm153, %vm171
    %vm188 = vmand %vm154, %vm172
    %vm189 = vmand %vm155, %vm173
    %vm190 = vmand %vm156, %vm174
    %vm191 = vmand %vm157, %vm175
    %vm192 = vmand %vm158, %vm176
    %vm193 = vmand %vm159, %vm177
    %vm194 = vmand %vm160, %vm178
    %vm195 = vmand %vm161, %vm179
    %vm196 = vmand %vm162, %vm180
    %vm197 = vmand %vm163, %vm181
    %vm198 = vmand %vm164, %vm182
    %vm199 = vmand %vm165, %vm183
    %vm200 = vmand %vm166, %vm184
    %vm201 = vmand %vm167, %vm185
    %vm202 = vmand %vm168, %vm186
    %v203 = vsel %vm187, 1, 0
    %v204 = vsel %vm188, 1, 0
    %v205 = vsel %vm189, 1, 0
    %v206 = vsel %vm190, 1, 0
    %v207 = vsel %vm191, 1, 0
    %v208 = vsel %vm192, 1, 0
    %v209 = vsel %vm193, 1, 0
    %v210 = vsel %vm194, 1, 0
    %v211 = vsel %vm195, 1, 0
    %v212 = vsel %vm196, 1, 0
    %v213 = vsel %vm197, 1, 0
    %v214 = vsel %vm198, 1, 0
    %v215 = vsel %vm199, 1, 0
    %v216 = vsel %vm200, 1, 0
    %v217 = vsel %vm201, 1, 0
    %v218 = vsel %vm202, 1, 0
    %v219 = vcvt.s32.f32 %v203
    %v220 = vcvt.s32.f32 %v204
    %v221 = vcvt.s32.f32 %v205
    %v222 = vcvt.s32.f32 %v206
    %v223 = vcvt.s32.f32 %v207
    %v224 = vcvt.s32.f32 %v208
    %v225 = vcvt.s32.f32 %v209
    %v226 = vcvt.s32.f32 %v210
    %v227 = vcvt.s32.f32 %v211
    %v228 = vcvt.s32.f32 %v212
    %v229 = vcvt.s32.f32 %v213
    %v230 = vcvt.s32.f32 %v214
    %v231 = vcvt.s32.f32 %v215
    %v232 = vcvt.s32.f32 %v216
    %v233 = vcvt.s32.f32 %v217
    %v234 = vcvt.s32.f32 %v218
    %v235 = vand.u32 %v234, 4294901760
    %236 = vmatpush.msra.mxu0 %v235
    %v237 = vand.u32 %v233, 4294901760
    %238 = vmatpush.msra.mxu0 %v237
    %v239 = vand.u32 %v232, 4294901760
    %240 = vmatpush.msra.mxu0 %v239
    %v241 = vand.u32 %v231, 4294901760
    %242 = vmatpush.msra.mxu0 %v241
    %v243 = vand.u32 %v230, 4294901760
    %244 = vmatpush.msra.mxu0 %v243
    %v245 = vand.u32 %v229, 4294901760
    %246 = vmatpush.msra.mxu0 %v245
    %v247 = vand.u32 %v228, 4294901760
    %248 = vmatpush.msra.mxu0 %v247
    %v249 = vand.u32 %v227, 4294901760
    %250 = vmatpush.msra.mxu0 %v249
    %v251 = vand.u32 %v226, 4294901760
    %252 = vmatpush.msra.mxu0 %v251
    %v253 = vand.u32 %v225, 4294901760
    %254 = vmatpush.msra.mxu0 %v253
    %v255 = vand.u32 %v224, 4294901760
    %256 = vmatpush.msra.mxu0 %v255
    %v257 = vand.u32 %v223, 4294901760
    %258 = vmatpush.msra.mxu0 %v257
    %v259 = vand.u32 %v222, 4294901760
    %260 = vmatpush.msra.mxu0 %v259
    %v261 = vand.u32 %v221, 4294901760
    %262 = vmatpush.msra.mxu0 %v261
    %v263 = vand.u32 %v220, 4294901760
    %264 = vmatpush.msra.mxu0 %v263
    %v265 = vand.u32 %v219, 4294901760
    %266 = vmatpush.msra.mxu0 %v265
    %v267 = vand.u32 %v129, 4294901760
    %v268 = vsub.f32 %v129, %v267
    %v269 = vand.u32 %v268, 4294901760
    %v270 = vsub.f32 %v268, %v269
    %v271 = vand.u32 %v270, 4294901760
    %272 = vmatmul.f32.gmra.mxu0 %v271
    %v273 = vpop.f32.mrf.mxu0
    %v274 = vadd.f32 1.0, %v273
    %v275 = vand.u32 %v130, 4294901760
    %v276 = vsub.f32 %v130, %v275
    %v277 = vand.u32 %v276, 4294901760
    %v278 = vsub.f32 %v276, %v277
    %v279 = vand.u32 %v278, 4294901760
    %280 = vmatmul.f32.gmra.mxu0 %v279
    %v281 = vpop.f32.mrf.mxu0
    %v282 = vadd.f32 1.0, %v281
    %v283 = vand.u32 %v131, 4294901760
    %v284 = vsub.f32 %v131, %v283
    %v285 = vand.u32 %v284, 4294901760
    %v286 = vsub.f32 %v284, %v285
    %v287 = vand.u32 %v286, 4294901760
    %288 = vmatmul.f32.gmra.mxu0 %v287
    %v289 = vpop.f32.mrf.mxu0
    %v290 = vadd.f32 1.0, %v289
    %v291 = vand.u32 %v132, 4294901760
    %v292 = vsub.f32 %v132, %v291
    %v293 = vand.u32 %v292, 4294901760
    %v294 = vsub.f32 %v292, %v293
    %v295 = vand.u32 %v294, 4294901760
    %296 = vmatmul.f32.gmra.mxu0 %v295
    %v297 = vpop.f32.mrf.mxu0
    %v298 = vadd.f32 1.0, %v297
    %299 = vdwg.mxu0
    %v300 = vand.u32 %v234, 4294901760
    %v301 = vsub.f32 %v234, %v300
    %v302 = vand.u32 %v301, 4294901760
    %v303 = vsub.f32 %v301, %v302
    %v304 = vand.u32 %v303, 4294901760
    %305 = vmatpush.msra.mxu0 %v304
    %v306 = vand.u32 %v233, 4294901760
    %v307 = vsub.f32 %v233, %v306
    %v308 = vand.u32 %v307, 4294901760
    %v309 = vsub.f32 %v307, %v308
    %v310 = vand.u32 %v309, 4294901760
    %311 = vmatpush.msra.mxu0 %v310
    %v312 = vand.u32 %v232, 4294901760
    %v313 = vsub.f32 %v232, %v312
    %v314 = vand.u32 %v313, 4294901760
    %v315 = vsub.f32 %v313, %v314
    %v316 = vand.u32 %v315, 4294901760
    %317 = vmatpush.msra.mxu0 %v316
    %v318 = vand.u32 %v231, 4294901760
    %v319 = vsub.f32 %v231, %v318
    %v320 = vand.u32 %v319, 4294901760
    %v321 = vsub.f32 %v319, %v320
    %v322 = vand.u32 %v321, 4294901760
    %323 = vmatpush.msra.mxu0 %v322
    %v324 = vand.u32 %v230, 4294901760
    %v325 = vsub.f32 %v230, %v324
    %v326 = vand.u32 %v325, 4294901760
    %v327 = vsub.f32 %v325, %v326
    %v328 = vand.u32 %v327, 4294901760
    %329 = vmatpush.msra.mxu0 %v328
    %v330 = vand.u32 %v229, 4294901760
    %v331 = vsub.f32 %v229, %v330
    %v332 = vand.u32 %v331, 4294901760
    %v333 = vsub.f32 %v331, %v332
    %v334 = vand.u32 %v333, 4294901760
    %335 = vmatpush.msra.mxu0 %v334
    %v336 = vand.u32 %v228, 4294901760
    %v337 = vsub.f32 %v228, %v336
    %v338 = vand.u32 %v337, 4294901760
    %v339 = vsub.f32 %v337, %v338
    %v340 = vand.u32 %v339, 4294901760
    %341 = vmatpush.msra.mxu0 %v340
    %v342 = vand.u32 %v227, 4294901760
    %v343 = vsub.f32 %v227, %v342
    %v344 = vand.u32 %v343, 4294901760
    %v345 = vsub.f32 %v343, %v344
    %v346 = vand.u32 %v345, 4294901760
    %347 = vmatpush.msra.mxu0 %v346
    %v348 = vand.u32 %v226, 4294901760
    %v349 = vsub.f32 %v226, %v348
    %v350 = vand.u32 %v349, 4294901760
    %v351 = vsub.f32 %v349, %v350
    %v352 = vand.u32 %v351, 4294901760
    %353 = vmatpush.msra.mxu0 %v352
    %v354 = vand.u32 %v225, 4294901760
    %v355 = vsub.f32 %v225, %v354
    %v356 = vand.u32 %v355, 4294901760
    %v357 = vsub.f32 %v355, %v356
    %v358 = vand.u32 %v357, 4294901760
    %359 = vmatpush.msra.mxu0 %v358
    %v360 = vand.u32 %v224, 4294901760
    %v361 = vsub.f32 %v224, %v360
    %v362 = vand.u32 %v361, 4294901760
    %v363 = vsub.f32 %v361, %v362
    %v364 = vand.u32 %v363, 4294901760
    %365 = vmatpush.msra.mxu0 %v364
    %v366 = vand.u32 %v223, 4294901760
    %v367 = vsub.f32 %v223, %v366
    %v368 = vand.u32 %v367, 4294901760
    %v369 = vsub.f32 %v367, %v368
    %v370 = vand.u32 %v369, 4294901760
    %371 = vmatpush.msra.mxu0 %v370
    %v372 = vand.u32 %v222, 4294901760
    %v373 = vsub.f32 %v222, %v372
    %v374 = vand.u32 %v373, 4294901760
    %v375 = vsub.f32 %v373, %v374
    %v376 = vand.u32 %v375, 4294901760
    %377 = vmatpush.msra.mxu0 %v376
    %v378 = vand.u32 %v221, 4294901760
    %v379 = vsub.f32 %v221, %v378
    %v380 = vand.u32 %v379, 4294901760
    %v381 = vsub.f32 %v379, %v380
    %v382 = vand.u32 %v381, 4294901760
    %383 = vmatpush.msra.mxu0 %v382
    %v384 = vand.u32 %v220, 4294901760
    %v385 = vsub.f32 %v220, %v384
    %v386 = vand.u32 %v385, 4294901760
    %v387 = vsub.f32 %v385, %v386
    %v388 = vand.u32 %v387, 4294901760
    %389 = vmatpush.msra.mxu0 %v388
    %v390 = vand.u32 %v219, 4294901760
    %v391 = vsub.f32 %v219, %v390
    %v392 = vand.u32 %v391, 4294901760
    %v393 = vsub.f32 %v391, %v392
    %v394 = vand.u32 %v393, 4294901760
    %395 = vmatpush.msra.mxu0 %v394
    %v396 = vand.u32 %v129, 4294901760
    %397 = vmatmul.f32.gmra.mxu0 %v396
    %v398 = vpop.f32.mrf.mxu0
    %v399 = vadd.f32 %v274, %v398
    %v400 = vand.u32 %v130, 4294901760
    %401 = vmatmul.f32.gmra.mxu0 %v400
    %v402 = vpop.f32.mrf.mxu0
    %v403 = vadd.f32 %v282, %v402
    %v404 = vand.u32 %v131, 4294901760
    %405 = vmatmul.f32.gmra.mxu0 %v404
    %v406 = vpop.f32.mrf.mxu0
    %v407 = vadd.f32 %v290, %v406
    %v408 = vand.u32 %v132, 4294901760
    %409 = vmatmul.f32.gmra.mxu0 %v408
    %v410 = vpop.f32.mrf.mxu0
    %v411 = vadd.f32 %v298, %v410
    %412 = vdwg.mxu0
    %v413 = vand.u32 %v234, 4294901760
    %v414 = vsub.f32 %v234, %v413
    %415 = vmatpush.msra.mxu0 %v414
    %v416 = vand.u32 %v233, 4294901760
    %v417 = vsub.f32 %v233, %v416
    %418 = vmatpush.msra.mxu0 %v417
    %v419 = vand.u32 %v232, 4294901760
    %v420 = vsub.f32 %v232, %v419
    %421 = vmatpush.msra.mxu0 %v420
    %v422 = vand.u32 %v231, 4294901760
    %v423 = vsub.f32 %v231, %v422
    %424 = vmatpush.msra.mxu0 %v423
    %v425 = vand.u32 %v230, 4294901760
    %v426 = vsub.f32 %v230, %v425
    %427 = vmatpush.msra.mxu0 %v426
    %v428 = vand.u32 %v229, 4294901760
    %v429 = vsub.f32 %v229, %v428
    %430 = vmatpush.msra.mxu0 %v429
    %v431 = vand.u32 %v228, 4294901760
    %v432 = vsub.f32 %v228, %v431
    %433 = vmatpush.msra.mxu0 %v432
    %v434 = vand.u32 %v227, 4294901760
    %v435 = vsub.f32 %v227, %v434
    %436 = vmatpush.msra.mxu0 %v435
    %v437 = vand.u32 %v226, 4294901760
    %v438 = vsub.f32 %v226, %v437
    %439 = vmatpush.msra.mxu0 %v438
    %v440 = vand.u32 %v225, 4294901760
    %v441 = vsub.f32 %v225, %v440
    %442 = vmatpush.msra.mxu0 %v441
    %v443 = vand.u32 %v224, 4294901760
    %v444 = vsub.f32 %v224, %v443
    %445 = vmatpush.msra.mxu0 %v444
    %v446 = vand.u32 %v223, 4294901760
    %v447 = vsub.f32 %v223, %v446
    %448 = vmatpush.msra.mxu0 %v447
    %v449 = vand.u32 %v222, 4294901760
    %v450 = vsub.f32 %v222, %v449
    %451 = vmatpush.msra.mxu0 %v450
    %v452 = vand.u32 %v221, 4294901760
    %v453 = vsub.f32 %v221, %v452
    %454 = vmatpush.msra.mxu0 %v453
    %v455 = vand.u32 %v220, 4294901760
    %v456 = vsub.f32 %v220, %v455
    %457 = vmatpush.msra.mxu0 %v456
    %v458 = vand.u32 %v219, 4294901760
    %v459 = vsub.f32 %v219, %v458
    %460 = vmatpush.msra.mxu0 %v459
    %v461 = vand.u32 %v129, 4294901760
    %v462 = vsub.f32 %v129, %v461
    %463 = vmatmul.f32.gmra.mxu0 %v462
    %v464 = vpop.f32.mrf.mxu0
    %v465 = vadd.f32 %v399, %v464
    %v466 = vand.u32 %v130, 4294901760
    %v467 = vsub.f32 %v130, %v466
    %468 = vmatmul.f32.gmra.mxu0 %v467
    %v469 = vpop.f32.mrf.mxu0
    %v470 = vadd.f32 %v403, %v469
    %v471 = vand.u32 %v131, 4294901760
    %v472 = vsub.f32 %v131, %v471
    %473 = vmatmul.f32.gmra.mxu0 %v472
    %v474 = vpop.f32.mrf.mxu0
    %v475 = vadd.f32 %v407, %v474
    %v476 = vand.u32 %v132, 4294901760
    %v477 = vsub.f32 %v132, %v476
    %478 = vmatmul.f32.gmra.mxu0 %v477
    %v479 = vpop.f32.mrf.mxu0
    %v480 = vadd.f32 %v411, %v479
    %481 = vdwg.mxu0
    %v482 = vand.u32 %v234, 4294901760
    %483 = vmatpush.msra.mxu0 %v482
    %v484 = vand.u32 %v233, 4294901760
    %485 = vmatpush.msra.mxu0 %v484
    %v486 = vand.u32 %v232, 4294901760
    %487 = vmatpush.msra.mxu0 %v486
    %v488 = vand.u32 %v231, 4294901760
    %489 = vmatpush.msra.mxu0 %v488
    %v490 = vand.u32 %v230, 4294901760
    %491 = vmatpush.msra.mxu0 %v490
    %v492 = vand.u32 %v229, 4294901760
    %493 = vmatpush.msra.mxu0 %v492
    %v494 = vand.u32 %v228, 4294901760
    %495 = vmatpush.msra.mxu0 %v494
    %v496 = vand.u32 %v227, 4294901760
    %497 = vmatpush.msra.mxu0 %v496
    %v498 = vand.u32 %v226, 4294901760
    %499 = vmatpush.msra.mxu0 %v498
    %v500 = vand.u32 %v225, 4294901760
    %501 = vmatpush.msra.mxu0 %v500
    %v502 = vand.u32 %v224, 4294901760
    %503 = vmatpush.msra.mxu0 %v502
    %v504 = vand.u32 %v223, 4294901760
    %505 = vmatpush.msra.mxu0 %v504
    %v506 = vand.u32 %v222, 4294901760
    %507 = vmatpush.msra.mxu0 %v506
    %v508 = vand.u32 %v221, 4294901760
    %509 = vmatpush.msra.mxu0 %v508
    %v510 = vand.u32 %v220, 4294901760
    %511 = vmatpush.msra.mxu0 %v510
    %v512 = vand.u32 %v219, 4294901760
    %513 = vmatpush.msra.mxu0 %v512
    %v514 = vand.u32 %v129, 4294901760
    %v515 = vsub.f32 %v129, %v514
    %v516 = vand.u32 %v515, 4294901760
    %517 = vmatmul.f32.gmra.mxu0 %v516
    %v518 = vpop.f32.mrf.mxu0
    %v519 = vadd.f32 %v465, %v518
    %v520 = vand.u32 %v130, 4294901760
    %v521 = vsub.f32 %v130, %v520
    %v522 = vand.u32 %v521, 4294901760
    %523 = vmatmul.f32.gmra.mxu0 %v522
    %v524 = vpop.f32.mrf.mxu0
    %v525 = vadd.f32 %v470, %v524
    %v526 = vand.u32 %v131, 4294901760
    %v527 = vsub.f32 %v131, %v526
    %v528 = vand.u32 %v527, 4294901760
    %529 = vmatmul.f32.gmra.mxu0 %v528
    %v530 = vpop.f32.mrf.mxu0
    %v531 = vadd.f32 %v475, %v530
    %v532 = vand.u32 %v132, 4294901760
    %v533 = vsub.f32 %v132, %v532
    %v534 = vand.u32 %v533, 4294901760
    %535 = vmatmul.f32.gmra.mxu0 %v534
    %v536 = vpop.f32.mrf.mxu0
    %v537 = vadd.f32 %v480, %v536
    %538 = vdwg.mxu0
    %v539 = vand.u32 %v234, 4294901760
    %v540 = vsub.f32 %v234, %v539
    %v541 = vand.u32 %v540, 4294901760
    %542 = vmatpush.msra.mxu0 %v541
    %v543 = vand.u32 %v233, 4294901760
    %v544 = vsub.f32 %v233, %v543
    %v545 = vand.u32 %v544, 4294901760
    %546 = vmatpush.msra.mxu0 %v545
    %v547 = vand.u32 %v232, 4294901760
    %v548 = vsub.f32 %v232, %v547
    %v549 = vand.u32 %v548, 4294901760
    %550 = vmatpush.msra.mxu0 %v549
    %v551 = vand.u32 %v231, 4294901760
    %v552 = vsub.f32 %v231, %v551
    %v553 = vand.u32 %v552, 4294901760
    %554 = vmatpush.msra.mxu0 %v553
    %v555 = vand.u32 %v230, 4294901760
    %v556 = vsub.f32 %v230, %v555
    %v557 = vand.u32 %v556, 4294901760
    %558 = vmatpush.msra.mxu0 %v557
    %v559 = vand.u32 %v229, 4294901760
    %v560 = vsub.f32 %v229, %v559
    %v561 = vand.u32 %v560, 4294901760
    %562 = vmatpush.msra.mxu0 %v561
    %v563 = vand.u32 %v228, 4294901760
    %v564 = vsub.f32 %v228, %v563
    %v565 = vand.u32 %v564, 4294901760
    %566 = vmatpush.msra.mxu0 %v565
    %v567 = vand.u32 %v227, 4294901760
    %v568 = vsub.f32 %v227, %v567
    %v569 = vand.u32 %v568, 4294901760
    %570 = vmatpush.msra.mxu0 %v569
    %v571 = vand.u32 %v226, 4294901760
    %v572 = vsub.f32 %v226, %v571
    %v573 = vand.u32 %v572, 4294901760
    %574 = vmatpush.msra.mxu0 %v573
    %v575 = vand.u32 %v225, 4294901760
    %v576 = vsub.f32 %v225, %v575
    %v577 = vand.u32 %v576, 4294901760
    %578 = vmatpush.msra.mxu0 %v577
    %v579 = vand.u32 %v224, 4294901760
    %v580 = vsub.f32 %v224, %v579
    %v581 = vand.u32 %v580, 4294901760
    %582 = vmatpush.msra.mxu0 %v581
    %v583 = vand.u32 %v223, 4294901760
    %v584 = vsub.f32 %v223, %v583
    %v585 = vand.u32 %v584, 4294901760
    %586 = vmatpush.msra.mxu0 %v585
    %v587 = vand.u32 %v222, 4294901760
    %v588 = vsub.f32 %v222, %v587
    %v589 = vand.u32 %v588, 4294901760
    %590 = vmatpush.msra.mxu0 %v589
    %v591 = vand.u32 %v221, 4294901760
    %v592 = vsub.f32 %v221, %v591
    %v593 = vand.u32 %v592, 4294901760
    %594 = vmatpush.msra.mxu0 %v593
    %v595 = vand.u32 %v220, 4294901760
    %v596 = vsub.f32 %v220, %v595
    %v597 = vand.u32 %v596, 4294901760
    %598 = vmatpush.msra.mxu0 %v597
    %v599 = vand.u32 %v219, 4294901760
    %v600 = vsub.f32 %v219, %v599
    %v601 = vand.u32 %v600, 4294901760
    %602 = vmatpush.msra.mxu0 %v601
    %v603 = vand.u32 %v129, 4294901760
    %604 = vmatmul.f32.gmra.mxu0 %v603
    %v605 = vpop.f32.mrf.mxu0
    %v606 = vadd.f32 %v519, %v605
    %v607 = vand.u32 %v130, 4294901760
    %608 = vmatmul.f32.gmra.mxu0 %v607
    %v609 = vpop.f32.mrf.mxu0
    %v610 = vadd.f32 %v525, %v609
    %v611 = vand.u32 %v131, 4294901760
    %612 = vmatmul.f32.gmra.mxu0 %v611
    %v613 = vpop.f32.mrf.mxu0
    %v614 = vadd.f32 %v531, %v613
    %v615 = vand.u32 %v132, 4294901760
    %616 = vmatmul.f32.gmra.mxu0 %v615
    %v617 = vpop.f32.mrf.mxu0
    %v618 = vadd.f32 %v537, %v617
    %619 = vdwg.mxu0
    %v620 = vand.u32 %v234, 4294901760
    %621 = vmatpush.msra.mxu0 %v620
    %v622 = vand.u32 %v233, 4294901760
    %623 = vmatpush.msra.mxu0 %v622
    %v624 = vand.u32 %v232, 4294901760
    %625 = vmatpush.msra.mxu0 %v624
    %v626 = vand.u32 %v231, 4294901760
    %627 = vmatpush.msra.mxu0 %v626
    %v628 = vand.u32 %v230, 4294901760
    %629 = vmatpush.msra.mxu0 %v628
    %v630 = vand.u32 %v229, 4294901760
    %631 = vmatpush.msra.mxu0 %v630
    %v632 = vand.u32 %v228, 4294901760
    %633 = vmatpush.msra.mxu0 %v632
    %v634 = vand.u32 %v227, 4294901760
    %635 = vmatpush.msra.mxu0 %v634
    %v636 = vand.u32 %v226, 4294901760
    %637 = vmatpush.msra.mxu0 %v636
    %v638 = vand.u32 %v225, 4294901760
    %639 = vmatpush.msra.mxu0 %v638
    %v640 = vand.u32 %v224, 4294901760
    %641 = vmatpush.msra.mxu0 %v640
    %v642 = vand.u32 %v223, 4294901760
    %643 = vmatpush.msra.mxu0 %v642
    %v644 = vand.u32 %v222, 4294901760
    %645 = vmatpush.msra.mxu0 %v644
    %v646 = vand.u32 %v221, 4294901760
    %647 = vmatpush.msra.mxu0 %v646
    %v648 = vand.u32 %v220, 4294901760
    %649 = vmatpush.msra.mxu0 %v648
    %v650 = vand.u32 %v219, 4294901760
    %651 = vmatpush.msra.mxu0 %v650
    %v652 = vand.u32 %v129, 4294901760
    %653 = vmatmul.f32.gmra.mxu0 %v652
    %v654 = vpop.f32.mrf.mxu0
    %v655 = vadd.f32 %v606, %v654
    %v656 = vand.u32 %v130, 4294901760
    %657 = vmatmul.f32.gmra.mxu0 %v656
    %v658 = vpop.f32.mrf.mxu0
    %v659 = vadd.f32 %v610, %v658
    %v660 = vand.u32 %v131, 4294901760
    %661 = vmatmul.f32.gmra.mxu0 %v660
    %v662 = vpop.f32.mrf.mxu0
    %v663 = vadd.f32 %v614, %v662
    %v664 = vand.u32 %v132, 4294901760
    %665 = vmatmul.f32.gmra.mxu0 %v664
    %v666 = vpop.f32.mrf.mxu0
    %v667 = vadd.f32 %v618, %v666
    %668 = vdwg.mxu0
    %v669 = vmax.f32 %v655, 0.0
    %v670 = vmax.f32 %v659, 0.0
    %v671 = vmax.f32 %v663, 0.0
    %v672 = vmax.f32 %v667, 0.0
    %s673 = sadd.s32 0, 0
    %s674 = smul.u32 %s673, 32
    %s675 = sadd.s32 %s674, 32
    %p676 = scmp.gt.s32.totalorder %s675, 25
    %p677 = scmp.le.s32.totalorder %s675, 25
    // Predicated region
    $region30: #{tpu_custom_call.1} parent=1 // pred_check
      %p678 = pneg %p677
    $region31: #{tpu_custom_call.1} parent=1 // pred_check_branch
      %680 = sbr.rel (%p678) target = $region33
    $region32: #{tpu_custom_call.1} parent=1 // pred_region
      %v681 = vld [vmem:[#allocation2] sm:$0xff]
      %v682 = vld [vmem:[#allocation2 + $0x8] sm:$0xff]
      %v683 = vld [vmem:[#allocation2 + $0x10] sm:$0xff]
      %v684 = vld [vmem:[#allocation2 + $0x18] sm:$0xff]
      %v685 = vadd.f32 %v681, %v669
      %v686 = vadd.f32 %v682, %v670
      %v687 = vadd.f32 %v683, %v671
      %v688 = vadd.f32 %v684, %v672
      %vm689 = vcmask 31744
      %690 = vst.msk [vmem:[#allocation2] sm:$0xff] %vm689, %v685
      %691 = vst.msk [vmem:[#allocation2 + $0x8] sm:$0xff] %vm689, %v686
      %692 = vst.msk [vmem:[#allocation2 + $0x10] sm:$0xff] %vm689, %v687
      %693 = vst.msk [vmem:[#allocation2 + $0x18] sm:$0xff] %vm689, %v688
    $region33: #{tpu_custom_call.1} parent=1 // pred_fallthru
      _
    // Predicated region
    $region34: #{tpu_custom_call.1} parent=1 // pred_check
      %p694 = pneg %p676
    $region35: #{tpu_custom_call.1} parent=1 // pred_check_branch
      %696 = sbr.rel (%p694) target = $region37
    $region36: #{tpu_custom_call.1} parent=1 // pred_region
      %v697 = vstv %s674
      %v698 = vadd.s32 %v697, %v134
      %v699 = vadd.s32 %v697, %v135
      %v700 = vadd.s32 %v697, %v136
      %v701 = vadd.s32 %v697, %v137
      %v702 = vld [vmem:[#allocation2] sm:$0xff]
      %v703 = vld [vmem:[#allocation2 + $0x8] sm:$0xff]
      %v704 = vld [vmem:[#allocation2 + $0x10] sm:$0xff]
      %v705 = vld [vmem:[#allocation2 + $0x18] sm:$0xff]
      %vm706 = vcmp.lt.s32.totalorder %v698, 25
      %vm707 = vcmp.lt.s32.totalorder %v699, 25
      %vm708 = vcmp.lt.s32.totalorder %v700, 25
      %vm709 = vcmp.lt.s32.totalorder %v701, 25
      %v710 = vsel %vm706, %v669, 0.0
      %v711 = vsel %vm707, %v670, 0.0
      %v712 = vsel %vm708, %v671, 0.0
      %v713 = vsel %vm709, %v672, 0.0
      %v714 = vadd.f32 %v702, %v710
      %v715 = vadd.f32 %v703, %v711
      %v716 = vadd.f32 %v704, %v712
      %v717 = vadd.f32 %v705, %v713
      %vm718 = vcmask 31744
      %719 = vst.msk [vmem:[#allocation2] sm:$0xff] %vm718, %v714
      %720 = vst.msk [vmem:[#allocation2 + $0x8] sm:$0xff] %vm718, %v715
      %721 = vst.msk [vmem:[#allocation2 + $0x10] sm:$0xff] %vm718, %v716
      %722 = vst.msk [vmem:[#allocation2 + $0x18] sm:$0xff] %vm718, %v717
    $region37: #{tpu_custom_call.1} parent=1 // pred_fallthru
      _
    // Predicated region
    $region38: #{tpu_custom_call.1} parent=1 // pred_check
      %p723 = pneg %p92
    $region39: #{tpu_custom_call.1} parent=1 // pred_check_branch
      %725 = sbr.rel (%p723) target = $region41
    $region40: #{tpu_custom_call.1} parent=1 // pred_region
      %v726 = vld [vmem:[#allocation2] sm:$0xff]
      %v727 = vld [vmem:[#allocation2 + $0x8] sm:$0xff]
      %v728 = vld [vmem:[#allocation2 + $0x10] sm:$0xff]
      %v729 = vld [vmem:[#allocation2 + $0x18] sm:$0xff]
      %vm730 = vcmask 31744
      %v731 = vsel %vm730, %v726, 0.0
      %v732 = vsel %vm730, %v727, 0.0
      %v733 = vadd.f32 %v731, %v732
      %v734 = vsel %vm730, %v728, 0.0
      %v735 = vadd.f32 %v733, %v734
      %v736 = vsel %vm730, %v729, 0.0
      %v737 = vadd.f32 %v735, %v736
      %738 = vadd.xlane.f32.xlu0 %v737
      %v739 = vpop.xlane.xlu0 %738
      %v740 = vrot.slane %v739, 4
      %v741 = vadd.f32 %v739, %v740
      %v742 = vrot.slane %v741, 2
      %v743 = vadd.f32 %v741, %v742
      %v744 = vrot.slane %v743, 1
      %v745 = vadd.f32 %v743, %v744
      %s746 = vtos %v745
      %v747 = vstv %s746
      %748 = vst [vmem:[#allocation9] sm:$0x1] %v747
    $region41: #{tpu_custom_call.1} parent=1 // pred_fallthru
      _
    // Predicated region
    $region42: #{tpu_custom_call.1} parent=1 // pred_check
      _
    $region43: #{tpu_custom_call.1} parent=1 // pred_check_branch
      %750 = sbr.rel (0) target = $region45
    $region44: #{tpu_custom_call.1} parent=1 // pred_region
      %752 = vsyncadd [#allocation5], 0
      %s754 = sshll.u32 [#allocation9], 4
      %s755 = int_to_ptr.vmem [resolvable:$true] %s754
      %s756 = sshll.u32 %s3, 4
      %s757 = int_to_ptr.hbm [resolvable:$true] %s756
      %759 = dma.vmem_to_hbm [thread:$0]  %s755, 16, %s757, [#allocation5]
    $region45: #{tpu_custom_call.1} parent=1 // pred_fallthru
      _
    // Predicated region
    $region46: #{tpu_custom_call.1} parent=1 // pred_check
      _
    $region47: #{tpu_custom_call.1} parent=1 // pred_check_branch
      %761 = sbr.rel (0) target = $region49
    $region48: #{tpu_custom_call.1} parent=1 // pred_region
      %763 = dma.done [#allocation5], 16
    $region49: #{tpu_custom_call.1} parent=1 // pred_fallthru
      _
    %764 = vsyncpa [#allocation4], 1
    %765 = vsyncpa [#allocation7], 1
    %766 = vsyncpa [#allocation5], 1

</llo_original>
